<compile_context>
chip_gen: v7x
topology: tpu7x:2x2x1
jax: 0.10.0
libtpu: 0.0.40
codegen_flags: <defaults>
</compile_context>

<pallas_src>
import jax
import jax.numpy as jnp
from jax import lax
from jax.experimental import pallas as pl
from jax.experimental.pallas import tpu as pltpu


# ---------------------------------------------------------------------------
# Model hyper-parameters (small, deterministic, consistent with the module).
# Real boltz uses token_s=384 -> embed=455; here token_s=32 -> embed=103.
# ---------------------------------------------------------------------------
TOKEN_S = 32
NUM_TOKENS = 33      # res_type / profile one-hot size
POCKET_DIM = 4       # pocket_feature one-hot size
EMBED_DIM = TOKEN_S + NUM_TOKENS + NUM_TOKENS + 1 + POCKET_DIM  # = 103


def _input_embedder_kernel(res_ref, prof_ref, del_ref, pocket_ref, out_ref):
    """One (batch, L-tile) block per grid step.

    res_ref    : (1, TL, 1)          int32   residue-type index (0..32)
    prof_ref   : (1, TL, NUM_TOKENS) float32 MSA profile
    del_ref    : (1, TL, 1)          float32 deletion mean
    pocket_ref : (1, TL, 1)          int32   pocket-type index (0..3)
    out_ref    : (1, TL, EMBED_DIM)  float32
    """
    tl = prof_ref.shape[1]

    res_idx = res_ref[...]        # (1, TL, 1) int32
    pocket_idx = pocket_ref[...]  # (1, TL, 1) int32
    profile = prof_ref[...]       # (1, TL, 33) f32
    del_mean = del_ref[...]       # (1, TL, 1) f32

    # Rebuild the one-hot encodings in-register (exactly equals casting the
    # original one-hot int tensors to float32).
    res_iota = lax.broadcasted_iota(jnp.int32, (1, tl, NUM_TOKENS), 2)
    pocket_iota = lax.broadcasted_iota(jnp.int32, (1, tl, POCKET_DIM), 2)
    res_onehot = (res_iota == res_idx).astype(jnp.float32)
    pocket_onehot = (pocket_iota == pocket_idx).astype(jnp.float32)

    # a = zeros (no_atom_encoder path).
    # TODO(synk): AtomAttentionEncoder is not provided in the reference; when
    # enabled, its [B, L, token_s] output would replace these zero channels.
    a = jnp.zeros((1, tl, TOKEN_S), dtype=jnp.float32)

    # Assemble the full embedding slab in-register and issue ONE store.
    out_ref[...] = jnp.concatenate(
        [a, res_onehot, profile, del_mean, pocket_onehot], axis=-1
    )


def _to_index(x, *, name: str) -> jax.Array:
    """Accept either a one-hot [B, L, C] tensor or an index [B, L] tensor."""
    x = jnp.asarray(x)
    if x.ndim == 3:
        # Module receives strictly one-hot tensors (boltz featurizer), so
        # argmax recovers the index exactly.
        x = jnp.argmax(x, axis=-1)
    assert x.ndim == 2, f"{name}: expected [B, L] or [B, L, C]"
    return x.astype(jnp.int32)[..., None]  # [B, L, 1]


def _choose_tile_l(L: int, tile_l) -> int:
    if tile_l is not None:
        assert L % tile_l == 0, "tile_l must divide L"
        assert tile_l == L or tile_l % 8 == 0, "tile_l must be a multiple of 8"
        return tile_l
    if L <= 2048:
        return L
    for cand in (2048, 1024, 512, 256, 128):
        if L % cand == 0:
            return cand
    return L  # fall back to a single full-L tile


def input_embedder_forward(feats: dict, no_atom_encoder: bool = True,
                           tile_l=None) -> jax.Array:
    """JAX/Pallas equivalent of InputEmbedder.forward (no_atom_encoder path)."""
    assert no_atom_encoder, "AtomAttentionEncoder path not implemented (see TODO)."

    res_idx = _to_index(feats["res_type"], name="res_type")              # [B,L,1] i32
    pocket_idx = _to_index(feats["pocket_feature"], name="pocket_feature")  # [B,L,1] i32
    profile = jnp.asarray(feats["profile"], dtype=jnp.float32)           # [B,L,33] f32
    B, L, _ = profile.shape
    deletion_mean = jnp.asarray(
        feats["deletion_mean"], dtype=jnp.float32).reshape(B, L, 1)      # [B,L,1] f32

    tl = _choose_tile_l(L, tile_l)
    nt = L // tl

    grid_spec = pltpu.PrefetchScalarGridSpec(
        num_scalar_prefetch=0,
        grid=(B, nt),
        in_specs=[
            pl.BlockSpec((1, tl, 1), lambda b, t: (b, t, 0)),           # res_idx
            pl.BlockSpec((1, tl, NUM_TOKENS), lambda b, t: (b, t, 0)),  # profile
            pl.BlockSpec((1, tl, 1), lambda b, t: (b, t, 0)),           # deletion_mean
            pl.BlockSpec((1, tl, 1), lambda b, t: (b, t, 0)),           # pocket_idx
        ],
        out_specs=pl.BlockSpec((1, tl, EMBED_DIM), lambda b, t: (b, t, 0)),
    )

    return pl.pallas_call(
        _input_embedder_kernel,
        out_shape=jax.ShapeDtypeStruct((B, L, EMBED_DIM), jnp.float32),
        grid_spec=grid_spec,
        compiler_params=pltpu.CompilerParams(
            # No reduction axes; both axes independent -> megacore-friendly.
            dimension_semantics=("parallel", "parallel"),
        ),
    )(res_idx, profile, deletion_mean, pocket_idx)


def _reference_forward(feats: dict) -> jax.Array:
    """Pure-JAX reference (mirrors the PyTorch forward with no_atom_encoder)."""
    res_type = jnp.asarray(feats["res_type"]).astype(jnp.float32)
    profile = jnp.asarray(feats["profile"]).astype(jnp.float32)
    deletion_mean = jnp.asarray(feats["deletion_mean"]).astype(jnp.float32)[..., None]
    pocket_feature = jnp.asarray(feats["pocket_feature"]).astype(jnp.float32)
    B, L, _ = res_type.shape
    a = jnp.zeros((B, L, TOKEN_S), dtype=jnp.float32)
    return jnp.concatenate(
        [a, res_type, profile, deletion_mean, pocket_feature], axis=-1
    )


def _make_feats(key, B, L):
    k1, k2, k3, k4 = jax.random.split(key, 4)
    res_idx = jax.random.randint(k1, (B, L), 0, NUM_TOKENS)
    res_type = jax.nn.one_hot(res_idx, NUM_TOKENS, dtype=jnp.int32)
    profile = jax.nn.softmax(jax.random.normal(k2, (B, L, NUM_TOKENS)), axis=-1)
    deletion_mean = jax.random.uniform(k3, (B, L))
    pocket_idx = jax.random.randint(k4, (B, L), 0, POCKET_DIM)
    pocket_feature = jax.nn.one_hot(pocket_idx, POCKET_DIM, dtype=jnp.int32)
    return {
        "res_type": res_type,
        "profile": profile,
        "deletion_mean": deletion_mean,
        "pocket_feature": pocket_feature,
    }


if __name__ == "__main__":
    key = jax.random.PRNGKey(0)
    k_small, k_tiled = jax.random.split(key)

    # --- small case: B=2, L=8 (single L tile per batch element) ---------
    B, L = 2, 8
    feats = _make_feats(k_small, B, L)
    out = jax.block_until_ready(input_embedder_forward(feats, no_atom_encoder=True))
    ref = _reference_forward(feats)
    assert out.shape == (B, L, EMBED_DIM), out.shape
    assert out.dtype == jnp.float32
    assert jnp.allclose(out, ref, atol=1e-6), "mismatch vs reference (small)"

    # --- tiled case: B=2, L=256, TL=128 (exercises the L-tiled pipeline) -
    B2, L2 = 2, 256
    feats2 = _make_feats(k_tiled, B2, L2)
    out2 = jax.block_until_ready(
        input_embedder_forward(feats2, no_atom_encoder=True, tile_l=128)
    )
    ref2 = _reference_forward(feats2)
    assert out2.shape == (B2, L2, EMBED_DIM), out2.shape
    assert jnp.allclose(out2, ref2, atol=1e-6), "mismatch vs reference (tiled)"

    print("KERNEL_OK")
</pallas_src>

<mosaic_0001>
module attributes {stable_mosaic.version = 11 : i64} {
  func.func @_input_embedder_kernel(%arg0: i32, %arg1: i32, %arg2: memref<1x8x1xi32, #tpu.memory_space<vmem>>, %arg3: memref<1x8x33xf32, #tpu.memory_space<vmem>>, %arg4: memref<1x8x1xf32, #tpu.memory_space<vmem>>, %arg5: memref<1x8x1xi32, #tpu.memory_space<vmem>>, %arg6: memref<1x8x103xf32, #tpu.memory_space<vmem>>) attributes {dimension_semantics = [#tpu.dimension_semantics<parallel>, #tpu.dimension_semantics<parallel>], iteration_bounds = array<i64: 2, 1>, scalar_prefetch = 0 : i64, scratch_operands = 0 : i64, tpu.core_type = #tpu.core_type<tc>, window_params = [{transform_indices = @transform_0, window_bounds = array<i64: 1, 8, 1>}, {transform_indices = @transform_1, window_bounds = array<i64: 1, 8, 33>}, {transform_indices = @transform_2, window_bounds = array<i64: 1, 8, 1>}, {transform_indices = @transform_3, window_bounds = array<i64: 1, 8, 1>}, {transform_indices = @transform_4, window_bounds = array<i64: 1, 8, 103>}]} {
    %c0 = arith.constant 0 : index
    %c0_0 = arith.constant 0 : index
    %c0_1 = arith.constant 0 : index
    %0 = vector.load %arg2[%c0, %c0_0, %c0_1] : memref<1x8x1xi32, #tpu.memory_space<vmem>>, vector<1x8x1xi32>
    %c0_2 = arith.constant 0 : index
    %c0_3 = arith.constant 0 : index
    %c0_4 = arith.constant 0 : index
    %1 = vector.load %arg5[%c0_2, %c0_3, %c0_4] : memref<1x8x1xi32, #tpu.memory_space<vmem>>, vector<1x8x1xi32>
    %c0_5 = arith.constant 0 : index
    %c0_6 = arith.constant 0 : index
    %c0_7 = arith.constant 0 : index
    %2 = vector.load %arg3[%c0_5, %c0_6, %c0_7] : memref<1x8x33xf32, #tpu.memory_space<vmem>>, vector<1x8x33xf32>
    %c0_8 = arith.constant 0 : index
    %c0_9 = arith.constant 0 : index
    %c0_10 = arith.constant 0 : index
    %3 = vector.load %arg4[%c0_8, %c0_9, %c0_10] : memref<1x8x1xf32, #tpu.memory_space<vmem>>, vector<1x8x1xf32>
    %4 = tpu.iota {dimensions = array<i32: 2>} : vector<1x8x33xi32>
    %5 = tpu.iota {dimensions = array<i32: 2>} : vector<1x8x4xi32>
    %6 = vector.broadcast %0 : vector<1x8x1xi32> to vector<1x8x33xi32>
    %7 = arith.cmpi eq, %4, %6 : vector<1x8x33xi32>
    %8 = arith.extui %7 : vector<1x8x33xi1> to vector<1x8x33xi32>
    %9 = arith.sitofp %8 : vector<1x8x33xi32> to vector<1x8x33xf32>
    %10 = vector.broadcast %1 : vector<1x8x1xi32> to vector<1x8x4xi32>
    %11 = arith.cmpi eq, %5, %10 : vector<1x8x4xi32>
    %12 = arith.extui %11 : vector<1x8x4xi1> to vector<1x8x4xi32>
    %13 = arith.sitofp %12 : vector<1x8x4xi32> to vector<1x8x4xf32>
    %cst = arith.constant 0.000000e+00 : f32
    %14 = vector.broadcast %cst : f32 to vector<1x8x32xf32>
    %15 = tpu.concatenate %14, %9, %2, %3, %13 in 2 : vector<1x8x32xf32>, vector<1x8x33xf32>, vector<1x8x33xf32>, vector<1x8x1xf32>, vector<1x8x4xf32> -> vector<1x8x103xf32>
    %c0_11 = arith.constant 0 : index
    %c0_12 = arith.constant 0 : index
    %c0_13 = arith.constant 0 : index
    %16 = vector.load %arg6[%c0_11, %c0_12, %c0_13] : memref<1x8x103xf32, #tpu.memory_space<vmem>>, vector<1x8x103xf32>
    tpu.vector_store %arg6[%c0_11, %c0_12, %c0_13], %15 {strides = array<i32>} : memref<1x8x103xf32, #tpu.memory_space<vmem>>, vector<1x8x103xf32>,
    return
  }
  func.func @transform_0(%arg0: i32, %arg1: i32) -> (i32, i32, i32) {
    %c0_i32 = arith.constant 0 : i32
    %c0_i32_0 = arith.constant 0 : i32
    return %arg0, %arg1, %c0_i32 : i32, i32, i32
  }
  func.func @transform_1(%arg0: i32, %arg1: i32) -> (i32, i32, i32) {
    %c0_i32 = arith.constant 0 : i32
    %c0_i32_0 = arith.constant 0 : i32
    return %arg0, %arg1, %c0_i32 : i32, i32, i32
  }
  func.func @transform_2(%arg0: i32, %arg1: i32) -> (i32, i32, i32) {
    %c0_i32 = arith.constant 0 : i32
    %c0_i32_0 = arith.constant 0 : i32
    return %arg0, %arg1, %c0_i32 : i32, i32, i32
  }
  func.func @transform_3(%arg0: i32, %arg1: i32) -> (i32, i32, i32) {
    %c0_i32 = arith.constant 0 : i32
    %c0_i32_0 = arith.constant 0 : i32
    return %arg0, %arg1, %c0_i32 : i32, i32, i32
  }
  func.func @transform_4(%arg0: i32, %arg1: i32) -> (i32, i32, i32) {
    %c0_i32 = arith.constant 0 : i32
    %c0_i32_0 = arith.constant 0 : i32
    return %arg0, %arg1, %c0_i32 : i32, i32, i32
  }
}

</mosaic_0001>

<llo_original>
// kernel: tpu_custom_call.1
$region0: #{tpu_custom_call.1}
  #allocation0 [shape = 'u32[]', space=smem, size = 0x4, offset = 0x4, fixed_abs, tag = 'smem constant byte address 0x4 - core index']
  #allocation1 [shape = 'u32[144,128]{1,0:T(1,128)}', space=vmem, size = 0x12000, scoped, tag = 'internal scratch']
  %s0 = inlined_call_operand.vmem [shape: s32[2,8,1], index: 0, kind: input, shape index: {}]
  %s1 = inlined_call_operand.vmem [shape: f32[2,8,33], index: 1, kind: input, shape index: {}]
  %s2 = inlined_call_operand.vmem [shape: f32[2,8,1], index: 2, kind: input, shape index: {}]
  %s3 = inlined_call_operand.vmem [shape: s32[2,8,1], index: 3, kind: input, shape index: {}]
  %s4 = inlined_call_operand.hbm [shape: f32[2,8,103], index: 4, kind: output, shape index: {}]
  %s5 = sld [smem:[#allocation0]]
  $region49: #{tpu_custom_call.1} parent=0
    _
  %s7 = ssub.s32 1, %s5
  %s8 = scalar_select 0, %s7, %s5
  $region1: #{tpu_custom_call.1} parent=0
    #allocation2 [shape = 'u8[8192]{0}', space=vmem, size = 0x2000, scoped, tag = 'output window, operand 0']
    #allocation3 [shape = 's32[2]{0}', space=sflag, size = 0x8, scoped, tag = 'scoped memory for tpu_custom_call.1']
    %9 = vsyncpa [#allocation3], 0
    %s10 = scalar_lea.sflag [#allocation3], 1
    %11 = vsyncpa %s10, 0
    loop: start=0, step=1, limit=4
    $region2: #{tpu_custom_call.1} parent=1 // loop_pre_header
      _
    $region3: #{tpu_custom_call.1} parent=1 // loop_header
      %s13 = sphi 0, %s17
      %p14 = scmp.ge.s32.totalorder %s13, 4
      %s20 = sphi 0, %s32
      %s21 = sphi 0, %s28
      %s22 = sphi 0, %s20
      %s23 = sphi 0, %s21
      %s24 = sphi 0, %s22
      %s25 = sphi 0, %s23
      %s37 = sphi 0, %s39
      %s40 = sphi 0, %s37
      %s41 = sphi 0, %s40
      %s57 = sphi 0, %s41
      %s65 = sphi 0, %s67
      %s68 = sphi 0, %s65
      %s69 = sphi 0, %s68
      %s85 = sphi 0, %s69
      %s93 = sphi 0, %s95
      %s96 = sphi 0, %s93
      %s97 = sphi 0, %s96
      %s113 = sphi 0, %s97
      %s121 = sphi 0, %s123
      %s124 = sphi 0, %s121
      %s125 = sphi 0, %s124
      %s141 = sphi 0, %s125
      %s149 = sphi 0, %s151
      %s152 = sphi 0, %s149
      %s153 = sphi 0, %s152
      %s169 = sphi 0, %s153
    $region4: #{tpu_custom_call.1} parent=1 // loop_header_branch
      %16 = sbr.rel (%p14) target = $region8
    $region5: #{tpu_custom_call.1} parent=1 // loop_body
      %s18 = ssub.s32 %s13, 1
      %s19 = ssub.s32 %s13, 2
      %s26 = sadd.s32 1, %s21
      %p27 = scmp.ge.s32.totalorder %s26, 1
      %s28 = scalar_select %p27, 0, %s26
      %s29 = sadd.s32 1, %s20
      %s30 = scalar_select %p27, %s29, %s20
      %p31 = scmp.ge.s32.totalorder %s30, 2
      %s32 = scalar_select %p31, 0, %s30
      %s33 = ssub.s32 %s20, %s32
      %s34 = ssub.s32 %s21, %s28
      %s35 = sor.u32 %s33, %s34
      %p36 = scmp.eq.s32.totalorder %s35, 0
      %s38 = sadd.s32 %s37, 1
      %s39 = scalar_select %p36, %s37, %s38
      %p42 = pneg %p36
      %p43 = scmp.eq.s32.totalorder %s13, 1
      %p44 = por %p42, %p43
      %p45 = scmp.ne.s32.totalorder %s37, %s40
      %p46 = scmp.eq.s32.totalorder %s13, 0
      %p47 = por %p45, %p46
      %p48 = scmp.ne.s32.totalorder %s37, %s40
      %p49 = scmp.eq.s32.totalorder %s18, 1
      %p50 = por %p48, %p49
      %p51 = scmp.ne.s32.totalorder %s40, %s41
      %p52 = scmp.eq.s32.totalorder %s18, 0
      %p53 = por %p51, %p52
      %p54 = scmp.ne.s32.totalorder %s40, %s41
      %p55 = scmp.eq.s32.totalorder %s19, 1
      %p56 = por %p54, %p55
      %p58 = scmp.ne.s32.totalorder %s41, %s57
      %p59 = scmp.eq.s32.totalorder %s19, 0
      %p60 = por %p58, %p59
      %s61 = ssub.s32 %s20, %s32
      %s62 = ssub.s32 %s21, %s28
      %s63 = sor.u32 %s61, %s62
      %p64 = scmp.eq.s32.totalorder %s63, 0
      %s66 = sadd.s32 %s65, 1
      %s67 = scalar_select %p64, %s65, %s66
      %p70 = pneg %p64
      %p71 = scmp.eq.s32.totalorder %s13, 1
      %p72 = por %p70, %p71
      %p73 = scmp.ne.s32.totalorder %s65, %s68
      %p74 = scmp.eq.s32.totalorder %s13, 0
      %p75 = por %p73, %p74
      %p76 = scmp.ne.s32.totalorder %s65, %s68
      %p77 = scmp.eq.s32.totalorder %s18, 1
      %p78 = por %p76, %p77
      %p79 = scmp.ne.s32.totalorder %s68, %s69
      %p80 = scmp.eq.s32.totalorder %s18, 0
      %p81 = por %p79, %p80
      %p82 = scmp.ne.s32.totalorder %s68, %s69
      %p83 = scmp.eq.s32.totalorder %s19, 1
      %p84 = por %p82, %p83
      %p86 = scmp.ne.s32.totalorder %s69, %s85
      %p87 = scmp.eq.s32.totalorder %s19, 0
      %p88 = por %p86, %p87
      %s89 = ssub.s32 %s20, %s32
      %s90 = ssub.s32 %s21, %s28
      %s91 = sor.u32 %s89, %s90
      %p92 = scmp.eq.s32.totalorder %s91, 0
      %s94 = sadd.s32 %s93, 1
      %s95 = scalar_select %p92, %s93, %s94
      %p98 = pneg %p92
      %p99 = scmp.eq.s32.totalorder %s13, 1
      %p100 = por %p98, %p99
      %p101 = scmp.ne.s32.totalorder %s93, %s96
      %p102 = scmp.eq.s32.totalorder %s13, 0
      %p103 = por %p101, %p102
      %p104 = scmp.ne.s32.totalorder %s93, %s96
      %p105 = scmp.eq.s32.totalorder %s18, 1
      %p106 = por %p104, %p105
      %p107 = scmp.ne.s32.totalorder %s96, %s97
      %p108 = scmp.eq.s32.totalorder %s18, 0
      %p109 = por %p107, %p108
      %p110 = scmp.ne.s32.totalorder %s96, %s97
      %p111 = scmp.eq.s32.totalorder %s19, 1
      %p112 = por %p110, %p111
      %p114 = scmp.ne.s32.totalorder %s97, %s113
      %p115 = scmp.eq.s32.totalorder %s19, 0
      %p116 = por %p114, %p115
      %s117 = ssub.s32 %s20, %s32
      %s118 = ssub.s32 %s21, %s28
      %s119 = sor.u32 %s117, %s118
      %p120 = scmp.eq.s32.totalorder %s119, 0
      %s122 = sadd.s32 %s121, 1
      %s123 = scalar_select %p120, %s121, %s122
      %p126 = pneg %p120
      %p127 = scmp.eq.s32.totalorder %s13, 1
      %p128 = por %p126, %p127
      %p129 = scmp.ne.s32.totalorder %s121, %s124
      %p130 = scmp.eq.s32.totalorder %s13, 0
      %p131 = por %p129, %p130
      %p132 = scmp.ne.s32.totalorder %s121, %s124
      %p133 = scmp.eq.s32.totalorder %s18, 1
      %p134 = por %p132, %p133
      %p135 = scmp.ne.s32.totalorder %s124, %s125
      %p136 = scmp.eq.s32.totalorder %s18, 0
      %p137 = por %p135, %p136
      %p138 = scmp.ne.s32.totalorder %s124, %s125
      %p139 = scmp.eq.s32.totalorder %s19, 1
      %p140 = por %p138, %p139
      %p142 = scmp.ne.s32.totalorder %s125, %s141
      %p143 = scmp.eq.s32.totalorder %s19, 0
      %p144 = por %p142, %p143
      %s145 = ssub.s32 %s20, %s32
      %s146 = ssub.s32 %s21, %s28
      %s147 = sor.u32 %s145, %s146
      %p148 = scmp.eq.s32.totalorder %s147, 0
      %s150 = sadd.s32 %s149, 1
      %s151 = scalar_select %p148, %s149, %s150
      %p154 = pneg %p148
      %p155 = scmp.eq.s32.totalorder %s13, 1
      %p156 = por %p154, %p155
      %p157 = scmp.ne.s32.totalorder %s149, %s152
      %p158 = scmp.eq.s32.totalorder %s13, 0
      %p159 = por %p157, %p158
      %p160 = scmp.ne.s32.totalorder %s149, %s152
      %p161 = scmp.eq.s32.totalorder %s18, 1
      %p162 = por %p160, %p161
      %p163 = scmp.ne.s32.totalorder %s152, %s153
      %p164 = scmp.eq.s32.totalorder %s18, 0
      %p165 = por %p163, %p164
      %p166 = scmp.ne.s32.totalorder %s152, %s153
      %p167 = scmp.eq.s32.totalorder %s19, 1
      %p168 = por %p166, %p167
      %p170 = scmp.ne.s32.totalorder %s153, %s169
      %p171 = scmp.eq.s32.totalorder %s19, 0
      %p172 = por %p170, %p171
      %p173 = scmp.le.s32.totalorder 1, %s13
      %p174 = scmp.lt.s32.totalorder %s13, 3
      %p175 = pnand %p173, %p174
      %p176 = pneg %p175
      // Predicated region
      $region9: #{tpu_custom_call.1} parent=5 // pred_check
        _
      $region10: #{tpu_custom_call.1} parent=5 // pred_check_branch
        %178 = sbr.rel (%p175) target = $region12
      $region11: #{tpu_custom_call.1} parent=5 // pred_region
        %s179 = ssub.s32 %s13, 1
      $region12: #{tpu_custom_call.1} parent=5 // pred_fallthru
        _
      %p180 = scmp.lt.s32.totalorder %s13, 2
      // Predicated region
      $region13: #{tpu_custom_call.1} parent=5 // pred_check
        %p181 = pneg %p180
      $region14: #{tpu_custom_call.1} parent=5 // pred_check_branch
        %183 = sbr.rel (%p181) target = $region16
      $region15: #{tpu_custom_call.1} parent=5 // pred_region
        // Predicated region
        $region17: #{tpu_custom_call.1} parent=15 // pred_check
          %p184 = pneg %p47
        $region18: #{tpu_custom_call.1} parent=15 // pred_check_branch
          %186 = sbr.rel (%p184) target = $region20
        $region19: #{tpu_custom_call.1} parent=15 // pred_region
          %p187 = scmp.lt.s32.totalorder %s20, 1
          %s188 = scalar_select %p187, %s20, 1
          %p189 = scmp.lt.s32.totalorder %s21, 0
          %s190 = scalar_select %p189, %s21, 0
          %s191 = sadd.s32 %s190, %s188
          %s192 = smul.addr %s191, 8
          %s193 = scalar_lea.vmem %s0, %s192
        $region20: #{tpu_custom_call.1} parent=15 // pred_fallthru
          _
        // Predicated region
        $region21: #{tpu_custom_call.1} parent=15 // pred_check
          %p194 = pneg %p75
        $region22: #{tpu_custom_call.1} parent=15 // pred_check_branch
          %196 = sbr.rel (%p194) target = $region24
        $region23: #{tpu_custom_call.1} parent=15 // pred_region
          %p197 = scmp.lt.s32.totalorder %s20, 1
          %s198 = scalar_select %p197, %s20, 1
          %p199 = scmp.lt.s32.totalorder %s21, 0
          %s200 = scalar_select %p199, %s21, 0
          %s201 = sadd.s32 %s200, %s198
          %s202 = smul.addr %s201, 8
          %s203 = scalar_lea.vmem %s1, %s202
        $region24: #{tpu_custom_call.1} parent=15 // pred_fallthru
          _
        // Predicated region
        $region25: #{tpu_custom_call.1} parent=15 // pred_check
          %p204 = pneg %p103
        $region26: #{tpu_custom_call.1} parent=15 // pred_check_branch
          %206 = sbr.rel (%p204) target = $region28
        $region27: #{tpu_custom_call.1} parent=15 // pred_region
          %p207 = scmp.lt.s32.totalorder %s20, 1
          %s208 = scalar_select %p207, %s20, 1
          %p209 = scmp.lt.s32.totalorder %s21, 0
          %s210 = scalar_select %p209, %s21, 0
          %s211 = sadd.s32 %s210, %s208
          %s212 = smul.addr %s211, 8
          %s213 = scalar_lea.vmem %s2, %s212
        $region28: #{tpu_custom_call.1} parent=15 // pred_fallthru
          _
        // Predicated region
        $region29: #{tpu_custom_call.1} parent=15 // pred_check
          %p214 = pneg %p131
        $region30: #{tpu_custom_call.1} parent=15 // pred_check_branch
          %216 = sbr.rel (%p214) target = $region32
        $region31: #{tpu_custom_call.1} parent=15 // pred_region
          %p217 = scmp.lt.s32.totalorder %s20, 1
          %s218 = scalar_select %p217, %s20, 1
          %p219 = scmp.lt.s32.totalorder %s21, 0
          %s220 = scalar_select %p219, %s21, 0
          %s221 = sadd.s32 %s220, %s218
          %s222 = smul.addr %s221, 8
          %s223 = scalar_lea.vmem %s3, %s222
        $region32: #{tpu_custom_call.1} parent=15 // pred_fallthru
          _
      $region16: #{tpu_custom_call.1} parent=5 // pred_fallthru
        _
      %p224 = scmp.le.s32.totalorder 1, %s13
      %p225 = scmp.lt.s32.totalorder %s13, 3
      %p226 = pnand %p224, %p225
      %p227 = pneg %p226
      // Predicated region
      $region33: #{tpu_custom_call.1} parent=5 // pred_check
        _
      $region34: #{tpu_custom_call.1} parent=5 // pred_check_branch
        %229 = sbr.rel (%p226) target = $region36
      $region35: #{tpu_custom_call.1} parent=5 // pred_region
        %s230 = ssub.s32 %s13, 1
        %p231 = scmp.lt.s32.totalorder %s22, 1
        %s232 = scalar_select %p231, %s22, 1
        %p233 = scmp.lt.s32.totalorder %s23, 0
        %s234 = scalar_select %p233, %s23, 0
        %s235 = sadd.s32 %s234, %s232
        %s236 = smul.addr %s235, 8
        %s237 = scalar_lea.vmem %s0, %s236
        %p238 = pneg %p53
        %p239 = pneg %p50
        %p240 = scmp.lt.s32.totalorder %s22, 1
        %s241 = scalar_select %p240, %s22, 1
        %p242 = scmp.lt.s32.totalorder %s23, 0
        %s243 = scalar_select %p242, %s23, 0
        %s244 = sadd.s32 %s243, %s241
        %s245 = smul.addr %s244, 8
        %s246 = scalar_lea.vmem %s1, %s245
        %p247 = pneg %p81
        %p248 = pneg %p78
        %p249 = scmp.lt.s32.totalorder %s22, 1
        %s250 = scalar_select %p249, %s22, 1
        %p251 = scmp.lt.s32.totalorder %s23, 0
        %s252 = scalar_select %p251, %s23, 0
        %s253 = sadd.s32 %s252, %s250
        %s254 = smul.addr %s253, 8
        %s255 = scalar_lea.vmem %s2, %s254
        %p256 = pneg %p109
        %p257 = pneg %p106
        %p258 = scmp.lt.s32.totalorder %s22, 1
        %s259 = scalar_select %p258, %s22, 1
        %p260 = scmp.lt.s32.totalorder %s23, 0
        %s261 = scalar_select %p260, %s23, 0
        %s262 = sadd.s32 %s261, %s259
        %s263 = smul.addr %s262, 8
        %s264 = scalar_lea.vmem %s3, %s263
        %p265 = pneg %p137
        %p266 = pneg %p134
        %p267 = pneg %p165
        %p268 = pneg %p162
        %s269 = sand.u32 %s152, 1
        %s270 = scalar_lea.sflag [#allocation3], %s269
        %s271 = sand.u32 %s152, 1
        %s272 = smul.addr %s271, 8
        %s273 = scalar_lea.vmem [#allocation2], %s272
        %p274 = scmp.lt.s32.totalorder %s22, 1
        %s275 = scalar_select %p274, %s22, 1
        %p276 = scmp.lt.s32.totalorder %s23, 0
        %s277 = scalar_select %p276, %s23, 0
        %s278 = sadd.s32 %s277, %s275
        %s279 = smul.addr %s278, 8
        %s280 = scalar_lea.vmem %s0, %s279
        %p281 = scmp.lt.s32.totalorder %s22, 1
        %s282 = scalar_select %p281, %s22, 1
        %p283 = scmp.lt.s32.totalorder %s23, 0
        %s284 = scalar_select %p283, %s23, 0
        %s285 = sadd.s32 %s284, %s282
        %s286 = smul.addr %s285, 8
        %s287 = scalar_lea.vmem %s1, %s286
        %p288 = scmp.lt.s32.totalorder %s22, 1
        %s289 = scalar_select %p288, %s22, 1
        %p290 = scmp.lt.s32.totalorder %s23, 0
        %s291 = scalar_select %p290, %s23, 0
        %s292 = sadd.s32 %s291, %s289
        %s293 = smul.addr %s292, 8
        %s294 = scalar_lea.vmem %s2, %s293
        %p295 = scmp.lt.s32.totalorder %s22, 1
        %s296 = scalar_select %p295, %s22, 1
        %p297 = scmp.lt.s32.totalorder %s23, 0
        %s298 = scalar_select %p297, %s23, 0
        %s299 = sadd.s32 %s298, %s296
        %s300 = smul.addr %s299, 8
        %s301 = scalar_lea.vmem %s3, %s300
        %v302 = vld [vmem:[%s280] sm:$0xff]
        %v303 = vld [vmem:[%s301] sm:$0xff]
        %v304 = vld [vmem:[%s287] sm:$0xff]
        %v305 = vld [vmem:[%s294] sm:$0xff]
        %v306 = vlaneseq
        %v307 = vand.u32 %v306, 127
        %308 = vset.pattern.permute.xlu0 0
        %309 = vperm.xlu0 %308, %v302
        %v310 = vpop.permute.xlu0 %309
        %vm311 = vcmp.eq.s32.totalorder %v307, %v310
        %v312 = vsel %vm311, 1, 0
        %v313 = vcvt.s32.f32 %v312
        %314 = vset.pattern.permute.xlu0 0
        %315 = vperm.xlu0 %314, %v303
        %v316 = vpop.permute.xlu0 %315
        %vm317 = vcmp.eq.s32.totalorder %v307, %v316
        %v318 = vsel %vm317, 1, 0
        %v319 = vcvt.s32.f32 %v318
        %321 = vrot.lane.b32.xlu0 %v313, 32
        %v322 = vpop.permute.xlu0 %321
        %325 = vrot.lane.b32.xlu0 %v304, 65
        %v326 = vpop.permute.xlu0 %325
        %329 = vrot.lane.b32.xlu0 %v305, 98
        %v330 = vpop.permute.xlu0 %329
        %333 = vrot.lane.b32.xlu0 %v319, 99
        %v334 = vpop.permute.xlu0 %333
        %vm336 = vcmask 261120
        %v337 = vsel %vm336, 0.0, %v322
        %vm338 = vcmask 531456
        %v339 = vsel %vm338, %v337, %v326
        %vm340 = vcmask 801792
        %v341 = vsel %vm340, %v339, %v330
        %vm342 = vcmask 809984
        %v343 = vsel %vm342, %v341, %v334
        %vm344 = vcmask 842752
        %345 = vst.msk [vmem:[%s273] sm:$0xff] %vm344, %v343
        %s346 = sand.u32 %s152, 1
        %s347 = scalar_lea.sflag [#allocation3], %s346
        %s348 = sand.u32 %s152, 1
        %s349 = smul.addr %s348, 8
        %s350 = scalar_lea.vmem [#allocation2], %s349
        // Predicated region
        $region37: #{tpu_custom_call.1} parent=35 // pred_check
          %p351 = pneg %p162
        $region38: #{tpu_custom_call.1} parent=35 // pred_check_branch
          %353 = sbr.rel (%p351) target = $region40
        $region39: #{tpu_custom_call.1} parent=35 // pred_region
          %s355 = ssub.s32 128, 128
          %356 = vsyncadd %s347, %s355
          %s357 = sadd.s32 %s23, %s22
          %s358 = smul.addr %s357, 128
          %s359 = scalar_lea.hbm %s4, %s358
          %s361 = sshll.u32 %s350, 4
          %s362 = int_to_ptr.vmem [resolvable:$true] %s361
          %364 = dma.vmem_to_hbm [thread:$0]  %s362, 128, %s359, %s347
        $region40: #{tpu_custom_call.1} parent=35 // pred_fallthru
          _
      $region36: #{tpu_custom_call.1} parent=5 // pred_fallthru
        _
      %p365 = scmp.le.s32.totalorder 2, %s13
      // Predicated region
      $region41: #{tpu_custom_call.1} parent=5 // pred_check
        %p366 = pneg %p365
      $region42: #{tpu_custom_call.1} parent=5 // pred_check_branch
        %368 = sbr.rel (%p366) target = $region44
      $region43: #{tpu_custom_call.1} parent=5 // pred_region
        %s369 = ssub.s32 %s13, 2
        // Predicated region
        $region45: #{tpu_custom_call.1} parent=43 // pred_check
          %p370 = pneg %p168
        $region46: #{tpu_custom_call.1} parent=43 // pred_check_branch
          %372 = sbr.rel (%p370) target = $region48
        $region47: #{tpu_custom_call.1} parent=43 // pred_region
          %s373 = sand.u32 %s153, 1
          %s374 = scalar_lea.sflag [#allocation3], %s373
          %s375 = sand.u32 %s153, 1
          %s376 = smul.addr %s375, 8
          %s377 = scalar_lea.vmem [#allocation2], %s376
          %378 = dma.done %s374, 128
        $region48: #{tpu_custom_call.1} parent=43 // pred_fallthru
          _
      $region44: #{tpu_custom_call.1} parent=5 // pred_fallthru
        _
    $region6: #{tpu_custom_call.1} parent=1 // loop_footer
      %s17 = sadd.s32 1, %s13
    $region7: #{tpu_custom_call.1} parent=1 // loop_footer_branch
      %12 = sbr.rel target = $region3
    $region8: #{tpu_custom_call.1} parent=1 // loop_exit
      _
    %379 = vsyncpa [#allocation3], 1
    %s380 = scalar_lea.sflag [#allocation3], 1
    %381 = vsyncpa %s380, 1

</llo_original>
